<compile_context>
chip_gen: v7x
topology: tpu7x:2x2x1
jax: 0.10.0
libtpu: 0.0.40
codegen_flags: <defaults>
</compile_context>

<pallas_src>
import jax
import jax.numpy as jnp
import numpy as np
from jax.experimental import pallas as pl
from jax.experimental.pallas import tpu as pltpu


def msdc_kernel(x_ref, w_ref, b_ref, out_ref):
    """One row tile: (tile, PACK*U)[bf16] @ (PACK*U, PACK*C)[bf16] + bias -> (tile, lane)."""
    out_ref[...] = (
        jnp.dot(x_ref[...], w_ref[...], preferred_element_type=jnp.float32)
        + b_ref[...]
    ).astype(out_ref.dtype)


def _round_up(a, m):
    return -(-a // m) * m


def _choose_pack(c_out, lane_width):
    """Pick padded channel count and rows-per-lane-row so the output lane width
    is always a multiple of 128 (unmasked stores)."""
    if c_out <= lane_width:
        c_pad = 1
        while c_pad < c_out:
            c_pad *= 2                       # next power of two divides lane_width
        return c_pad, lane_width // c_pad
    return _round_up(c_out, 128), 1


def multi_scale_dilated_conv(x, weights, biases, dilations, K,
                             row_tile_cap=8192, lane_width=128,
                             out_dtype=jnp.float32):
    """x: (B, T, 1) f32.  weights[i]: (C_out, 1, K); biases[i]: (C_out,).
    lane_width: 128 (v5e default) or 256 (fills v6e/v7x's 256-wide MXU)."""
    B, T, c_in = x.shape
    assert c_in == 1, "module contract: input is (B, T, 1)"
    C_out = weights[0].shape[0]
    D = len(dilations)
    pads = tuple((K - 1) * d // 2 for d in dilations)
    P = max(pads)

    # ---- unique tap offsets; fold duplicates + the 1/D mean into the weights --
    off_to_col = {}
    uniq_offsets = []
    for di, d in enumerate(dilations):
        base = P - pads[di]                                 # per-dilation pad alignment
        for k in range(K):
            off = base + k * d
            if off not in off_to_col:
                off_to_col[off] = len(uniq_offsets)
                uniq_offsets.append(off)
    U = len(uniq_offsets)

    Wu = jnp.zeros((U, C_out), jnp.float32)
    for di, d in enumerate(dilations):
        base = P - pads[di]
        for k in range(K):
            u = off_to_col[base + k * d]
            Wu = Wu.at[u].add(jnp.transpose(weights[di][:, 0, k]) / D)
    b_mean = jnp.mean(jnp.stack(biases, axis=0), axis=0)    # (C_out,)

    # ---- lane-dense packing (PACK logical rows per 128/256-lane output row) ---
    C_pad, PACK = _choose_pack(C_out, lane_width)
    if C_pad != C_out:                                      # keep stores unmasked
        Wu = jnp.pad(Wu, ((0, 0), (0, C_pad - C_out)))
        b_mean = jnp.pad(b_mean, (0, C_pad - C_out))
    C_lane = C_pad * PACK
    DK2 = U * PACK
    W2 = jnp.kron(jnp.eye(PACK, dtype=jnp.float32), Wu).astype(jnp.bfloat16)
    b2 = jnp.tile(b_mean, PACK)[None, :]                    # (1, C_lane) f32

    # ---- im2col on the tiny 1-channel stream (bf16, unique offsets only) ------
    x_pad = jnp.pad(x[..., 0], ((0, 0), (P, P))).astype(jnp.bfloat16)   # (B, T+2P)
    cols = [x_pad[:, o:o + T] for o in uniq_offsets]
    X = jnp.stack(cols, axis=-1).reshape(B * T, U)          # (B*T, U) bf16

    R = B * T
    G = _round_up(R, PACK) // PACK                          # packed rows
    if G * PACK != R:                                       # tiny (< PACK rows) pad
        X = jnp.pad(X, ((0, G * PACK - R), (0, 0)))
    X2 = X.reshape(G, DK2)                                  # free row-major reshape

    # ---- row tiling: big tiles, even step count for v7x's two TCs, cdiv grid --
    tile = min(row_tile_cap, max(16, _round_up(-(-G // 2), 16)))
    tile = max(16, min(tile, _round_up(G, 16)))
    num_tiles = -(-G // tile)
    if num_tiles > 1 and num_tiles % 2 == 1:                # even split across 2 TCs
        num_tiles += 1
        tile = max(16, _round_up(-(-G // num_tiles), 16))
        num_tiles = -(-G // tile)

    out_itemsize = jnp.dtype(out_dtype).itemsize
    cost = pl.CostEstimate(
        flops=2 * G * DK2 * C_lane,
        transcendentals=0,
        bytes_accessed=int(X2.size * 2 + W2.size * 2 + b2.size * 4
                           + G * C_lane * out_itemsize))

    out2 = pl.pallas_call(
        msdc_kernel,
        out_shape=jax.ShapeDtypeStruct((G, C_lane), out_dtype),
        grid=(num_tiles,),
        in_specs=[
            pl.BlockSpec((tile, DK2), lambda i: (i, 0)),     # bf16 im2col row tile
            pl.BlockSpec((DK2, C_lane), lambda i: (0, 0)),   # bf16 packed weights (resident)
            pl.BlockSpec((1, C_lane), lambda i: (0, 0)),     # f32 packed mean bias
        ],
        out_specs=pl.BlockSpec((tile, C_lane), lambda i: (i, 0)),
        compiler_params=pltpu.CompilerParams(
            dimension_semantics=("parallel",),
            vmem_limit_bytes=32 * 1024 * 1024),
        cost_estimate=cost,
    )(X2, W2, b2)

    # Unpack: free row-major reshape, then drop pad rows / pad channels.
    return out2.reshape(G * PACK, C_pad)[:R, :C_out].reshape(B, T, C_out)


def reference_forward(x, weights, biases, dilations, K):
    """Pure-JAX reference mirroring the PyTorch forward (for validation)."""
    xc = jnp.transpose(x, (0, 2, 1))  # (B, 1, T) -- NCW like PyTorch
    outs = []
    for w, b, d in zip(weights, biases, dilations):
        p = (K - 1) * d // 2
        y = jax.lax.conv_general_dilated(
            xc, w, window_strides=(1,), padding=[(p, p)],
            rhs_dilation=(d,), dimension_numbers=("NCH", "OIH", "NCH"),
            precision=jax.lax.Precision.HIGHEST)
        y = y + b[None, :, None]
        outs.append(jnp.transpose(y, (0, 2, 1)))  # (B, T, C)
    return jnp.mean(jnp.stack(outs, axis=0), axis=0)


if __name__ == "__main__":
    B, T = 2, 16
    in_channels = 1           # fixed by the forward's (B, T, 1) input contract
    C_out = 64
    K = 5                     # odd kernel size -> all dilation branches same length
    dilations = [1, 2, 4]
    D = len(dilations)

    key = jax.random.PRNGKey(0)
    keys = jax.random.split(key, 2 * D + 1)
    weights = [0.1 * jax.random.normal(keys[2 * i], (C_out, in_channels, K),
                                       jnp.float32) for i in range(D)]
    biases = [0.1 * jax.random.normal(keys[2 * i + 1], (C_out,), jnp.float32)
              for i in range(D)]
    x = jax.random.normal(keys[-1], (B, T, in_channels), jnp.float32)

    out = jax.block_until_ready(
        multi_scale_dilated_conv(x, weights, biases, dilations, K))
    ref = jax.block_until_ready(reference_forward(x, weights, biases, dilations, K))

    # Tolerance accounts for bf16 MXU operands (per-product relative error
    # ~2^-8; worst-case accumulated error over 9 taps is a few 1e-3 at these
    # 0.1-scale weights).  Any indexing/packing/weight-folding bug would give
    # O(0.1-1) errors and is still caught.
    np.testing.assert_allclose(np.asarray(out), np.asarray(ref), rtol=2e-2, atol=2e-2)

    print("KERNEL_OK")
</pallas_src>

<mosaic_0001>
module attributes {stable_mosaic.version = 11 : i64} {
  func.func @msdc_kernel(%arg0: i32, %arg1: memref<16x18xbf16, #tpu.memory_space<vmem>>, %arg2: memref<18x128xbf16, #tpu.memory_space<vmem>>, %arg3: memref<1x128xf32, #tpu.memory_space<vmem>>, %arg4: memref<16x128xf32, #tpu.memory_space<vmem>>) attributes {dimension_semantics = [#tpu.dimension_semantics<parallel>], iteration_bounds = array<i64: 1>, scalar_prefetch = 0 : i64, scratch_operands = 0 : i64, tpu.core_type = #tpu.core_type<tc>, window_params = [{transform_indices = @transform_0, window_bounds = array<i64: 16, 18>}, {pipeline_mode = #tpu.pipeline_mode<synchronous>, transform_indices = @transform_1, window_bounds = array<i64: 18, 128>}, {pipeline_mode = #tpu.pipeline_mode<synchronous>, transform_indices = @transform_2, window_bounds = array<i64: 1, 128>}, {transform_indices = @transform_3, window_bounds = array<i64: 16, 128>}]} {
    %c0 = arith.constant 0 : index
    %c0_0 = arith.constant 0 : index
    %0 = vector.load %arg1[%c0, %c0_0] : memref<16x18xbf16, #tpu.memory_space<vmem>>, vector<16x18xbf16>
    %c0_1 = arith.constant 0 : index
    %c0_2 = arith.constant 0 : index
    %1 = vector.load %arg2[%c0_1, %c0_2] : memref<18x128xbf16, #tpu.memory_space<vmem>>, vector<18x128xbf16>
    %cst = arith.constant dense<0.000000e+00> : vector<16x128xf32>
    %2 = tpu.matmul %0, %1, %cst {dimension_numbers = #tpu.dot_dimension_numbers<[1], [0], [0], [1], [0, 0, 1, 1], [], []>} : vector<16x18xbf16>, vector<18x128xbf16>, vector<16x128xf32> -> vector<16x128xf32>
    %c0_3 = arith.constant 0 : index
    %c0_4 = arith.constant 0 : index
    %3 = vector.load %arg3[%c0_3, %c0_4] : memref<1x128xf32, #tpu.memory_space<vmem>>, vector<1x128xf32>
    %4 = vector.broadcast %3 : vector<1x128xf32> to vector<16x128xf32>
    %5 = arith.addf %2, %4 : vector<16x128xf32>
    %c0_5 = arith.constant 0 : index
    %c0_6 = arith.constant 0 : index
    %6 = vector.load %arg4[%c0_5, %c0_6] : memref<16x128xf32, #tpu.memory_space<vmem>>, vector<16x128xf32>
    tpu.vector_store %arg4[%c0_5, %c0_6], %5 {strides = array<i32>} : memref<16x128xf32, #tpu.memory_space<vmem>>, vector<16x128xf32>,
    return
  }
  func.func @transform_0(%arg0: i32) -> (i32, i32) {
    %c0_i32 = arith.constant 0 : i32
    %c0_i32_0 = arith.constant 0 : i32
    return %arg0, %c0_i32 : i32, i32
  }
  func.func @transform_1(%arg0: i32) -> (i32, i32) {
    %c0_i32 = arith.constant 0 : i32
    %c0_i32_0 = arith.constant 0 : i32
    %c0_i32_1 = arith.constant 0 : i32
    return %c0_i32, %c0_i32_0 : i32, i32
  }
  func.func @transform_2(%arg0: i32) -> (i32, i32) {
    %c0_i32 = arith.constant 0 : i32
    %c0_i32_0 = arith.constant 0 : i32
    %c0_i32_1 = arith.constant 0 : i32
    return %c0_i32, %c0_i32_0 : i32, i32
  }
  func.func @transform_3(%arg0: i32) -> (i32, i32) {
    %c0_i32 = arith.constant 0 : i32
    %c0_i32_0 = arith.constant 0 : i32
    return %arg0, %c0_i32 : i32, i32
  }
}

</mosaic_0001>

<llo_original>
// kernel: tpu_custom_call.1
$region0: #{tpu_custom_call.1}
  #allocation0 [shape = 'u32[]', space=smem, size = 0x4, offset = 0x4, fixed_abs, tag = 'smem constant byte address 0x4 - core index']
  #allocation1 [shape = 'u32[144,128]{1,0:T(1,128)}', space=vmem, size = 0x12000, scoped, tag = 'internal scratch']
  %s0 = inlined_call_operand.hbm [shape: bf16[16,18], index: 0, kind: input, shape index: {}]
  %s1 = inlined_call_operand.hbm [shape: bf16[18,128], index: 1, kind: input, shape index: {}]
  %s2 = inlined_call_operand.vmem [shape: f32[1,128], index: 2, kind: input, shape index: {}]
  %s3 = inlined_call_operand.hbm [shape: f32[16,128], index: 3, kind: output, shape index: {}]
  %s4 = sld [smem:[#allocation0]]
  $region30: #{tpu_custom_call.1} parent=0
    _
  %s6 = ssub.s32 1, %s4
  %s7 = scalar_select 0, %s6, %s4
  $region1: #{tpu_custom_call.1} parent=0
    #allocation2 [shape = 'u8[4096]{0}', space=vmem, size = 0x1000, scoped, tag = 'input window, operand 0, single buffered']
    #allocation3 [shape = 's32[1]{0}', space=sflag, size = 0x4, scoped, tag = 'scoped memory for tpu_custom_call.1']
    #allocation4 [shape = 's32[1]{0}', space=sflag, size = 0x4, scoped, tag = 'scoped memory for tpu_custom_call.1']
    #allocation5 [shape = 'u8[6144]{0}', space=vmem, size = 0x1800, scoped, tag = 'input window, operand 1, single buffered']
    #allocation6 [shape = 's32[1]{0}', space=sflag, size = 0x4, scoped, tag = 'scoped memory for tpu_custom_call.1']
    #allocation7 [shape = 'u8[8192]{0}', space=vmem, size = 0x2000, scoped, tag = 'output window, operand 0, single buffered']
    %8 = vsyncpa [#allocation3], 0
    %9 = vsyncpa [#allocation6], 0
    %10 = vsyncpa [#allocation4], 0
    // Predicated region
    $region2: #{tpu_custom_call.1} parent=1 // pred_check
      _
    $region3: #{tpu_custom_call.1} parent=1 // pred_check_branch
      %12 = sbr.rel (0) target = $region5
    $region4: #{tpu_custom_call.1} parent=1 // pred_region
      %s14 = ssub.s32 128, 128
      %15 = vsyncadd [#allocation3], %s14
      %s16 = sshll.u32 [#allocation2], 4
      %s17 = int_to_ptr.vmem [resolvable:$true] %s16
      %22 = dma.hbm_to_vmem [thread:$0]  %s0, 128, %s17, [#allocation3], 64, 64, 4
    $region5: #{tpu_custom_call.1} parent=1 // pred_fallthru
      _
    // Predicated region
    $region6: #{tpu_custom_call.1} parent=1 // pred_check
      _
    $region7: #{tpu_custom_call.1} parent=1 // pred_check_branch
      %24 = sbr.rel (0) target = $region9
    $region8: #{tpu_custom_call.1} parent=1 // pred_region
      %s26 = ssub.s32 192, 192
      %27 = vsyncadd [#allocation6], %s26
      %s28 = sshll.u32 [#allocation5], 4
      %s29 = int_to_ptr.vmem [resolvable:$true] %s28
      %34 = dma.hbm_to_vmem [thread:$0]  %s1, 192, %s29, [#allocation6], 64, 64, 4
    $region9: #{tpu_custom_call.1} parent=1 // pred_fallthru
      _
    // Predicated region
    $region10: #{tpu_custom_call.1} parent=1 // pred_check
      _
    $region11: #{tpu_custom_call.1} parent=1 // pred_check_branch
      %36 = sbr.rel (0) target = $region13
    $region12: #{tpu_custom_call.1} parent=1 // pred_region
      _
    $region13: #{tpu_custom_call.1} parent=1 // pred_fallthru
      _
    // Predicated region
    $region14: #{tpu_custom_call.1} parent=1 // pred_check
      _
    $region15: #{tpu_custom_call.1} parent=1 // pred_check_branch
      %38 = sbr.rel (0) target = $region17
    $region16: #{tpu_custom_call.1} parent=1 // pred_region
      %39 = dma.done [#allocation3], 128
    $region17: #{tpu_custom_call.1} parent=1 // pred_fallthru
      _
    // Predicated region
    $region18: #{tpu_custom_call.1} parent=1 // pred_check
      _
    $region19: #{tpu_custom_call.1} parent=1 // pred_check_branch
      %41 = sbr.rel (0) target = $region21
    $region20: #{tpu_custom_call.1} parent=1 // pred_region
      %42 = dma.done [#allocation6], 192
    $region21: #{tpu_custom_call.1} parent=1 // pred_fallthru
      _
    %v44 = vld [vmem:[#allocation2] sm:$0xf]
    %v45 = vld [vmem:[#allocation2 + $0x4] sm:$0xf]
    %v46 = vld [vmem:[#allocation5] sm:$0xf]
    %v47 = vld [vmem:[#allocation5 + $0x4] sm:$0xf]
    %v48 = vld [vmem:[#allocation5 + $0x8] sm:$0x1]
    %v49 = vld [vmem:[%s2] sm:$0x1]
    %v51 = vlaneseq
    %v52 = vshrl.u32 %v51, 7
    %v53 = vsub.s32 0, %v52
    %v54 = vrot.slane %v49, %v53
    %v58 = vunpack.c.l.b16 %v44
    %v59 = vunpack.c.l.b16 %v45
    %v60 = vpack.c.b16 %v59, %v58
    %v64 = vunpack.c.l.b16 %v46
    %v65 = vunpack.c.l.b16 %v47
    %v66 = vunpack.c.l.b16 %v48
    %v67 = vpack.c.b16 %v65, %v64
    %v68 = vpack.c.b16 %v66, %v66
    %vm70 = vcmask 146432
    %v72 = vsel %vm70, %v60, 0
    %vm74 = vcmask 1040384
    %v76 = vsel %vm74, %v68, 0
    %78 = vmatprep.subr.bf16.mxu0 0
    %79 = vmatpush1.bf16.msra.mxu0 %v67
    %80 = vmatprep.subr.bf16.mxu0 0
    %81 = vmatpush1.bf16.msra.mxu0 %v76
    %82 = vmatprep.subr.bf16.mxu0 0
    %83 = vmatpush1.bf16.msra.mxu0 0
    %84 = vmatprep.subr.bf16.mxu0 0
    %85 = vmatpush1.bf16.msra.mxu0 0
    %86 = vmatprep.subr.bf16.mxu0 0
    %87 = vmatpush1.bf16.msra.mxu0 0
    %88 = vmatprep.subr.bf16.mxu0 0
    %89 = vmatpush1.bf16.msra.mxu0 0
    %90 = vmatprep.subr.bf16.mxu0 0
    %91 = vmatpush1.bf16.msra.mxu0 0
    %92 = vmatprep.subr.bf16.mxu0 0
    %93 = vmatpush1.bf16.msra.mxu0 0
    %94 = vmatprep.subr.bf16.mxu0 0
    %95 = vmatpush1.bf16.msra.mxu0 0
    %96 = vmatprep.subr.bf16.mxu0 0
    %97 = vmatpush1.bf16.msra.mxu0 0
    %98 = vmatprep.subr.bf16.mxu0 0
    %99 = vmatpush1.bf16.msra.mxu0 0
    %100 = vmatprep.subr.bf16.mxu0 0
    %101 = vmatpush1.bf16.msra.mxu0 0
    %102 = vmatprep.subr.bf16.mxu0 0
    %103 = vmatpush1.bf16.msra.mxu0 0
    %104 = vmatprep.subr.bf16.mxu0 0
    %105 = vmatpush1.bf16.msra.mxu0 0
    %106 = vmatprep.subr.bf16.mxu0 0
    %107 = vmatpush1.bf16.msra.mxu0 0
    %108 = vmatprep.subr.bf16.mxu0 0
    %109 = vmatpush1.bf16.msra.mxu0 0
    %110 = vmatprep.mubr.bf16.mxu0 0
    %111 = vmatmul.mubr.bf16.gmra.mrb[0].mxu0 %v72
    %v112 = vpop.f32.mrb[0].mxu0
    %v113 = vadd.f32 %v54, %v112
    %v114 = vpop.f32.mrb[0].mxu0
    %v115 = vpop.f32.mrb[0].mxu0
    %v116 = vadd.f32 %v54, %v115
    %v117 = vpop.f32.mrb[0].mxu0
    %118 = vdwg.mxu0
    %119 = vst [vmem:[#allocation7] sm:$0xff] %v113
    %120 = vst [vmem:[#allocation7 + $0x8] sm:$0xff] %v116
    // Predicated region
    $region22: #{tpu_custom_call.1} parent=1 // pred_check
      _
    $region23: #{tpu_custom_call.1} parent=1 // pred_check_branch
      %122 = sbr.rel (0) target = $region25
    $region24: #{tpu_custom_call.1} parent=1 // pred_region
      %s124 = ssub.s32 256, 256
      %125 = vsyncadd [#allocation4], %s124
      %s126 = sshll.u32 [#allocation7], 4
      %s127 = int_to_ptr.vmem [resolvable:$true] %s126
      %132 = dma.vmem_to_hbm [thread:$0]  %s127, 256, %s3, [#allocation4], 128, 128, 8
    $region25: #{tpu_custom_call.1} parent=1 // pred_fallthru
      _
    // Predicated region
    $region26: #{tpu_custom_call.1} parent=1 // pred_check
      _
    $region27: #{tpu_custom_call.1} parent=1 // pred_check_branch
      %134 = sbr.rel (0) target = $region29
    $region28: #{tpu_custom_call.1} parent=1 // pred_region
      %135 = dma.done [#allocation4], 256
    $region29: #{tpu_custom_call.1} parent=1 // pred_fallthru
      _
    %136 = vsyncpa [#allocation3], 1
    %137 = vsyncpa [#allocation6], 1
    %138 = vsyncpa [#allocation4], 1

</llo_original>
